<compile_context>
chip_gen: v7x
topology: tpu7x:2x2x1
jax: 0.10.0
libtpu: 0.0.40
codegen_flags: <defaults>
</compile_context>

<pallas_src>
import functools

import jax
import jax.numpy as jnp
from jax.experimental import pallas as pl
from jax.experimental.pallas import tpu as pltpu

_TARGET_IN_BLOCK_BYTES = 2 * 1024 * 1024  # ~2 MiB input block -> ~85% of HBM roofline


def _round_down(v: int, m: int) -> int:
    return (v // m) * m


def _aux_kernel(x_ref, w_ref, b_ref, o_ref, *, activation: str,
                in_features: int, out_features: int):
    # x_ref: (C, ts, tl) VMEM   w_ref: (O*C,) SMEM   b_ref: (O,) SMEM
    # o_ref: (O, ts, tl) VMEM
    x = x_ref[...].astype(jnp.float32)  # dense (C, ts, tl) tile, f32 math everywhere

    # Hoist SMEM scalar reads (one sld + broadcast each) out of the FMA loop.
    w = [[w_ref[o * in_features + c] for c in range(in_features)]
         for o in range(out_features)]
    b = [b_ref[o] for o in range(out_features)]

    outs = []
    for o in range(out_features):
        acc = x[0] * w[o][0] + b[o]                 # (ts, tl) full-vreg FMA
        for c in range(1, in_features):
            acc = acc + x[c] * w[o][c]
        if activation == "sigmoid":
            # exp on EUP; approx reciprocal also on EUP (no full-precision VPU divide).
            act = pl.reciprocal(1.0 + jnp.exp(-acc), approx=True)
        else:  # tanh
            act = jnp.tanh(acc)
        outs.append(act)
    o_ref[...] = jnp.stack(outs, axis=0).astype(o_ref.dtype)  # single dense store


def auxiliary_layer(x_nchw, weight, bias, *, activation: str = "sigmoid"):
    """Pallas equivalent of AuxiliaryLayer.forward.

    x_nchw : (N, C, H, W)
    weight : (O, C) or (O, C, 1, 1)  -- the 1x1 Conv2d kernel
    bias   : (O,)
    returns: (N, O, H, W) in x's dtype
    """
    assert activation in ("sigmoid", "tanh"), activation
    N, C, H, W = x_nchw.shape
    if weight.ndim == 4:
        weight = weight.reshape(weight.shape[0], weight.shape[1])
    O = weight.shape[0]
    assert weight.shape == (O, C), weight.shape
    L = H * W
    itemsize = jnp.dtype(x_nchw.dtype).itemsize

    # Generation-aware VMEM budget (v7x: 64 MiB/TC; v5e/v6e: 128 MiB).
    try:
        vmem_cap = pltpu.get_tpu_info().vmem_capacity_bytes
    except Exception:  # pragma: no cover - conservative fallback
        vmem_cap = 64 * 1024 * 1024
    target_in_bytes = max(128 * 1024, min(_TARGET_IN_BLOCK_BYTES, vmem_cap // 16))

    # ---- Spatial tiling: view H*W as (rows, cols), cols on lanes. ----
    if L % 128 == 0:
        cols = 128
        for cand in (1024, 512, 256):
            if L % cand == 0 and L // cand >= 8:
                cols = cand
                break
        rows = L // cols
        ts_raw = max(1, target_in_bytes // (C * cols * itemsize))
        if ts_raw >= rows or rows <= 8:
            ts = rows                                   # full dim -> always legal
        else:
            ts = max(8, _round_down(ts_raw, 8))         # sublane-aligned tile
        # v7x has 2 TensorCores: make sure the parallel grid has >= 2 blocks.
        if N * pl.cdiv(rows, ts) < 2 and rows >= 16:
            ts = max(8, _round_down((rows + 1) // 2, 8))
        tl = cols
    else:
        # Ragged spatial size (e.g. 14x14): single row, tile the lane axis in
        # 128-multiples; Pallas masks the ragged tail block.
        rows, cols = 1, L
        ts = 1
        tl = _round_down(min(L, max(128, target_in_bytes // (C * itemsize))), 128)
        if tl < 128:
            tl = L                                      # tiny odd L: one full block
        elif N * pl.cdiv(cols, tl) < 2 and tl > 256:
            tl = max(128, _round_down(pl.cdiv(cols, 2), 128))

    num_r = pl.cdiv(rows, ts)
    num_l = pl.cdiv(cols, tl)

    # Free reshape: NCHW -> (N, C, rows, cols) keeps memory order (no transpose).
    x_view = x_nchw.reshape(N, C, rows, cols)
    w_flat = weight.reshape(O * C).astype(jnp.float32)  # SMEM scalars
    b_flat = bias.reshape(O).astype(jnp.float32)        # SMEM scalars

    kernel = functools.partial(_aux_kernel, activation=activation,
                               in_features=C, out_features=O)

    cost = pl.CostEstimate(
        flops=2 * N * L * C * O,
        transcendentals=N * L * O,
        bytes_accessed=itemsize * N * L * (C + O) + 4 * (O * C + O),
    )

    out_view = pl.pallas_call(
        kernel,
        out_shape=jax.ShapeDtypeStruct((N, O, rows, cols), x_nchw.dtype),
        grid_spec=pltpu.PrefetchScalarGridSpec(
            num_scalar_prefetch=0,
            grid=(N, num_r, num_l),
            in_specs=[
                # batch dim squeezed; kernel sees a dense (C, ts, tl) tile
                pl.BlockSpec((None, C, ts, tl), lambda n, r, l: (n, 0, r, l)),
                pl.BlockSpec(memory_space=pltpu.MemorySpace.SMEM),  # weights
                pl.BlockSpec(memory_space=pltpu.MemorySpace.SMEM),  # bias
            ],
            out_specs=pl.BlockSpec((None, O, ts, tl), lambda n, r, l: (n, 0, r, l)),
        ),
        compiler_params=pltpu.CompilerParams(
            dimension_semantics=("parallel", "parallel", "parallel"),
            vmem_limit_bytes=32 * 1024 * 1024,
        ),
        cost_estimate=cost,
    )(x_view, w_flat, b_flat)

    return out_view.reshape(N, O, H, W)


if __name__ == "__main__":
    key = jax.random.PRNGKey(0)
    k_x, k_w, k_b = jax.random.split(key, 3)

    N, C, H, W = 2, 4, 16, 16
    O = 1  # out_features default

    x = jax.random.normal(k_x, (N, C, H, W), dtype=jnp.float32)
    # Deterministic synthetic parameters (Conv2d(in_features, out_features, 1)).
    weight = jax.random.normal(k_w, (O, C), dtype=jnp.float32) * 0.1
    bias = jax.random.normal(k_b, (O,), dtype=jnp.float32) * 0.1

    # sigmoid branch (approx-reciprocal denominator -> slightly looser tolerance)
    out = auxiliary_layer(x, weight, bias, activation="sigmoid")
    out = jax.block_until_ready(out)
    ref = jax.nn.sigmoid(
        jnp.einsum("nchw,oc->nohw", x, weight) + bias.reshape(1, O, 1, 1)
    )
    assert out.shape == (N, O, H, W), out.shape
    assert jnp.allclose(out, ref, atol=2e-3, rtol=2e-3), \
        float(jnp.max(jnp.abs(out - ref)))

    # tanh branch
    out_t = auxiliary_layer(x, weight, bias, activation="tanh")
    out_t = jax.block_until_ready(out_t)
    ref_t = jnp.tanh(
        jnp.einsum("nchw,oc->nohw", x, weight) + bias.reshape(1, O, 1, 1)
    )
    assert jnp.allclose(out_t, ref_t, atol=2e-3, rtol=2e-3), \
        float(jnp.max(jnp.abs(out_t - ref_t)))

    print("KERNEL_OK")
</pallas_src>

<mosaic_0001>
module attributes {stable_mosaic.version = 11 : i64} {
  func.func @_aux_kernel(%arg0: i32, %arg1: i32, %arg2: i32, %arg3: memref<1x4x2x128xf32, #tpu.memory_space<vmem>>, %arg4: memref<4xf32, #tpu.memory_space<smem>>, %arg5: memref<1xf32, #tpu.memory_space<smem>>, %arg6: memref<1x1x2x128xf32, #tpu.memory_space<vmem>>) attributes {dimension_semantics = [#tpu.dimension_semantics<parallel>, #tpu.dimension_semantics<parallel>, #tpu.dimension_semantics<parallel>], iteration_bounds = array<i64: 2, 1, 1>, scalar_prefetch = 0 : i64, scratch_operands = 0 : i64, tpu.core_type = #tpu.core_type<tc>, window_params = [{transform_indices = @transform_0, window_bounds = array<i64: 1, 4, 2, 128>}, {transform_indices = @transform_1, window_bounds = array<i64: 4>}, {transform_indices = @transform_2, window_bounds = array<i64: 1>}, {transform_indices = @transform_3, window_bounds = array<i64: 1, 1, 2, 128>}]} {
    %c0 = arith.constant 0 : index
    %c0_0 = arith.constant 0 : index
    %c0_1 = arith.constant 0 : index
    %c0_2 = arith.constant 0 : index
    %0 = vector.load %arg3[%c0, %c0_0, %c0_1, %c0_2] : memref<1x4x2x128xf32, #tpu.memory_space<vmem>>, vector<1x4x2x128xf32>
    %1 = vector.shape_cast %0 : vector<1x4x2x128xf32> to vector<4x2x128xf32>
    %c0_3 = arith.constant 0 : index
    %2 = memref.load %arg4[%c0_3] : memref<4xf32, #tpu.memory_space<smem>>
    %c1 = arith.constant 1 : index
    %3 = memref.load %arg4[%c1] : memref<4xf32, #tpu.memory_space<smem>>
    %c2 = arith.constant 2 : index
    %4 = memref.load %arg4[%c2] : memref<4xf32, #tpu.memory_space<smem>>
    %c3 = arith.constant 3 : index
    %5 = memref.load %arg4[%c3] : memref<4xf32, #tpu.memory_space<smem>>
    %c0_4 = arith.constant 0 : index
    %6 = memref.load %arg5[%c0_4] : memref<1xf32, #tpu.memory_space<smem>>
    %7 = vector.extract_strided_slice %1 {offsets = [0, 0, 0], sizes = [1, 2, 128], strides = [1, 1, 1]} : vector<4x2x128xf32> to vector<1x2x128xf32>
    %8 = vector.shape_cast %7 : vector<1x2x128xf32> to vector<2x128xf32>
    %9 = vector.broadcast %2 : f32 to vector<2x128xf32>
    %10 = arith.mulf %8, %9 : vector<2x128xf32>
    %11 = vector.broadcast %6 : f32 to vector<2x128xf32>
    %12 = arith.addf %10, %11 : vector<2x128xf32>
    %13 = vector.extract_strided_slice %1 {offsets = [1, 0, 0], sizes = [1, 2, 128], strides = [1, 1, 1]} : vector<4x2x128xf32> to vector<1x2x128xf32>
    %14 = vector.shape_cast %13 : vector<1x2x128xf32> to vector<2x128xf32>
    %15 = vector.broadcast %3 : f32 to vector<2x128xf32>
    %16 = arith.mulf %14, %15 : vector<2x128xf32>
    %17 = arith.addf %12, %16 : vector<2x128xf32>
    %18 = vector.extract_strided_slice %1 {offsets = [2, 0, 0], sizes = [1, 2, 128], strides = [1, 1, 1]} : vector<4x2x128xf32> to vector<1x2x128xf32>
    %19 = vector.shape_cast %18 : vector<1x2x128xf32> to vector<2x128xf32>
    %20 = vector.broadcast %4 : f32 to vector<2x128xf32>
    %21 = arith.mulf %19, %20 : vector<2x128xf32>
    %22 = arith.addf %17, %21 : vector<2x128xf32>
    %23 = vector.extract_strided_slice %1 {offsets = [3, 0, 0], sizes = [1, 2, 128], strides = [1, 1, 1]} : vector<4x2x128xf32> to vector<1x2x128xf32>
    %24 = vector.shape_cast %23 : vector<1x2x128xf32> to vector<2x128xf32>
    %25 = vector.broadcast %5 : f32 to vector<2x128xf32>
    %26 = arith.mulf %24, %25 : vector<2x128xf32>
    %27 = arith.addf %22, %26 : vector<2x128xf32>
    %cst = arith.constant 0.000000e+00 : f32
    %28 = vector.broadcast %cst : f32 to vector<2x128xf32>
    %29 = arith.subf %28, %27 : vector<2x128xf32>
    %30 = math.exp %29 : vector<2x128xf32>
    %cst_5 = arith.constant 1.000000e+00 : f32
    %31 = vector.broadcast %cst_5 : f32 to vector<2x128xf32>
    %32 = arith.addf %31, %30 : vector<2x128xf32>
    %33 = tpu.reciprocal %32 {approx = true} : vector<2x128xf32> -> vector<2x128xf32>
    %34 = vector.shape_cast %33 : vector<2x128xf32> to vector<1x2x128xf32>
    %c0_6 = arith.constant 0 : index
    %c0_7 = arith.constant 0 : index
    %c0_8 = arith.constant 0 : index
    %c0_9 = arith.constant 0 : index
    %35 = vector.load %arg6[%c0_6, %c0_7, %c0_8, %c0_9] : memref<1x1x2x128xf32, #tpu.memory_space<vmem>>, vector<1x1x2x128xf32>
    %36 = vector.shape_cast %35 : vector<1x1x2x128xf32> to vector<1x2x128xf32>
    %37 = vector.shape_cast %34 : vector<1x2x128xf32> to vector<1x1x2x128xf32>
    tpu.vector_store %arg6[%c0_6, %c0_7, %c0_8, %c0_9], %37 {strides = array<i32>} : memref<1x1x2x128xf32, #tpu.memory_space<vmem>>, vector<1x1x2x128xf32>,
    return
  }
  func.func @transform_0(%arg0: i32, %arg1: i32, %arg2: i32) -> (i32, i32, i32, i32) {
    %c0_i32 = arith.constant 0 : i32
    %c0_i32_0 = arith.constant 0 : i32
    return %arg0, %c0_i32, %arg1, %arg2 : i32, i32, i32, i32
  }
  func.func @transform_1(%arg0: i32, %arg1: i32, %arg2: i32) -> i32 {
    %c0_i32 = arith.constant 0 : i32
    %c0_i32_0 = arith.constant 0 : i32
    return %c0_i32 : i32
  }
  func.func @transform_2(%arg0: i32, %arg1: i32, %arg2: i32) -> i32 {
    %c0_i32 = arith.constant 0 : i32
    %c0_i32_0 = arith.constant 0 : i32
    return %c0_i32 : i32
  }
  func.func @transform_3(%arg0: i32, %arg1: i32, %arg2: i32) -> (i32, i32, i32, i32) {
    %c0_i32 = arith.constant 0 : i32
    %c0_i32_0 = arith.constant 0 : i32
    return %arg0, %c0_i32, %arg1, %arg2 : i32, i32, i32, i32
  }
}

</mosaic_0001>

<llo_original>
// kernel: tpu_custom_call.1
$region0: #{tpu_custom_call.1}
  #allocation0 [shape = 'u32[]', space=smem, size = 0x4, offset = 0x4, fixed_abs, tag = 'smem constant byte address 0x4 - core index']
  #allocation1 [shape = 'u32[144,128]{1,0:T(1,128)}', space=vmem, size = 0x12000, scoped, tag = 'internal scratch']
  #allocation2 [shape = 'f32[1]{0:T(128)S(6)}', space=smem, size = 0x200, scoped, tag = 'scoped memory for tpu_custom_call.1']
  %s0 = inlined_call_operand.hbm [shape: f32[2,4,2,128], index: 0, kind: input, shape index: {}]
  %s1 = inlined_call_operand.vmem [shape: f32[4], index: 1, kind: input, shape index: {}]
  %s2 = inlined_call_operand.<no memory space> [shape: f32[1], index: 2, kind: input, shape index: {}]
  %s3 = inlined_call_operand.hbm [shape: f32[2,1,2,128], index: 3, kind: output, shape index: {}]
  %s4 = sld [smem:[#allocation0]]
  $region53: #{tpu_custom_call.1} parent=0
    _
  %s6 = ssub.s32 1, %s4
  %s7 = scalar_select 0, %s6, %s4
  %8 = sst [smem:[#allocation2]] %s2
  $region1: #{tpu_custom_call.1} parent=0
    #allocation3 [shape = 'u8[8192]{0}', space=vmem, size = 0x2000, scoped, tag = 'input window, operand 0']
    #allocation4 [shape = 's32[2]{0}', space=sflag, size = 0x8, scoped, tag = 'scoped memory for tpu_custom_call.1']
    #allocation5 [shape = 's32[2]{0}', space=sflag, size = 0x8, scoped, tag = 'scoped memory for tpu_custom_call.1']
    #allocation6 [shape = 's32[2]{0}', space=sflag, size = 0x8, scoped, tag = 'scoped memory for tpu_custom_call.1']
    #allocation7 [shape = 'u8[512]{0}', space=smem, size = 0x200, scoped, tag = 'input window, operand 1, single buffered']
    #allocation8 [shape = 'u8[2048]{0}', space=vmem, size = 0x800, scoped, tag = 'output window, operand 0']
    %9 = vsyncpa [#allocation4], 0
    %s10 = scalar_lea.sflag [#allocation4], 1
    %11 = vsyncpa %s10, 0
    %12 = vsyncpa [#allocation6], 0
    %13 = vsyncpa [#allocation5], 0
    %s14 = scalar_lea.sflag [#allocation5], 1
    %15 = vsyncpa %s14, 0
    loop: start=0, step=1, limit=4
    $region2: #{tpu_custom_call.1} parent=1 // loop_pre_header
      _
    $region3: #{tpu_custom_call.1} parent=1 // loop_header
      %s17 = sphi 0, %s21
      %p18 = scmp.ge.s32.totalorder %s17, 4
      %s24 = sphi 0, %s43
      %s25 = sphi 0, %s39
      %s26 = sphi 0, %s35
      %s27 = sphi 0, %s24
      %s28 = sphi 0, %s25
      %s29 = sphi 0, %s26
      %s30 = sphi 0, %s27
      %s31 = sphi 0, %s28
      %s32 = sphi 0, %s29
      %s50 = sphi 0, %s52
      %s53 = sphi 0, %s50
      %s54 = sphi 0, %s53
      %s70 = sphi 0, %s54
      %s74 = sphi 0, %s74
      %s76 = sphi 0, %s74
      %s77 = sphi 0, %s76
      %s91 = sphi 0, %s77
      %s95 = sphi 0, %s95
      %s97 = sphi 0, %s95
      %s98 = sphi 0, %s97
      %s112 = sphi 0, %s98
      %s122 = sphi 0, %s124
      %s125 = sphi 0, %s122
      %s126 = sphi 0, %s125
      %s142 = sphi 0, %s126
    $region4: #{tpu_custom_call.1} parent=1 // loop_header_branch
      %20 = sbr.rel (%p18) target = $region8
    $region5: #{tpu_custom_call.1} parent=1 // loop_body
      %s22 = ssub.s32 %s17, 1
      %s23 = ssub.s32 %s17, 2
      %s33 = sadd.s32 1, %s26
      %p34 = scmp.ge.s32.totalorder %s33, 1
      %s35 = scalar_select %p34, 0, %s33
      %s36 = sadd.s32 1, %s25
      %s37 = scalar_select %p34, %s36, %s25
      %p38 = scmp.ge.s32.totalorder %s37, 1
      %s39 = scalar_select %p38, 0, %s37
      %s40 = sadd.s32 1, %s24
      %s41 = scalar_select %p38, %s40, %s24
      %p42 = scmp.ge.s32.totalorder %s41, 2
      %s43 = scalar_select %p42, 0, %s41
      %s44 = ssub.s32 %s24, %s43
      %s45 = ssub.s32 %s25, %s39
      %s46 = sor.u32 %s44, %s45
      %s47 = ssub.s32 %s26, %s35
      %s48 = sor.u32 %s46, %s47
      %p49 = scmp.eq.s32.totalorder %s48, 0
      %s51 = sadd.s32 %s50, 1
      %s52 = scalar_select %p49, %s50, %s51
      %p55 = pneg %p49
      %p56 = scmp.eq.s32.totalorder %s17, 1
      %p57 = por %p55, %p56
      %p58 = scmp.ne.s32.totalorder %s50, %s53
      %p59 = scmp.eq.s32.totalorder %s17, 0
      %p60 = por %p58, %p59
      %p61 = scmp.ne.s32.totalorder %s50, %s53
      %p62 = scmp.eq.s32.totalorder %s22, 1
      %p63 = por %p61, %p62
      %p64 = scmp.ne.s32.totalorder %s53, %s54
      %p65 = scmp.eq.s32.totalorder %s22, 0
      %p66 = por %p64, %p65
      %p67 = scmp.ne.s32.totalorder %s53, %s54
      %p68 = scmp.eq.s32.totalorder %s23, 1
      %p69 = por %p67, %p68
      %p71 = scmp.ne.s32.totalorder %s54, %s70
      %p72 = scmp.eq.s32.totalorder %s23, 0
      %p73 = por %p71, %p72
      %s75 = sadd.s32 %s74, 1
      %p78 = scmp.eq.s32.totalorder %s17, 1
      %p79 = scmp.ne.s32.totalorder %s74, %s76
      %p80 = scmp.eq.s32.totalorder %s17, 0
      %p81 = por %p79, %p80
      %p82 = scmp.ne.s32.totalorder %s74, %s76
      %p83 = scmp.eq.s32.totalorder %s22, 1
      %p84 = por %p82, %p83
      %p85 = scmp.ne.s32.totalorder %s76, %s77
      %p86 = scmp.eq.s32.totalorder %s22, 0
      %p87 = por %p85, %p86
      %p88 = scmp.ne.s32.totalorder %s76, %s77
      %p89 = scmp.eq.s32.totalorder %s23, 1
      %p90 = por %p88, %p89
      %p92 = scmp.ne.s32.totalorder %s77, %s91
      %p93 = scmp.eq.s32.totalorder %s23, 0
      %p94 = por %p92, %p93
      %s96 = sadd.s32 %s95, 1
      %p99 = scmp.eq.s32.totalorder %s17, 1
      %p100 = scmp.ne.s32.totalorder %s95, %s97
      %p101 = scmp.eq.s32.totalorder %s17, 0
      %p102 = por %p100, %p101
      %p103 = scmp.ne.s32.totalorder %s95, %s97
      %p104 = scmp.eq.s32.totalorder %s22, 1
      %p105 = por %p103, %p104
      %p106 = scmp.ne.s32.totalorder %s97, %s98
      %p107 = scmp.eq.s32.totalorder %s22, 0
      %p108 = por %p106, %p107
      %p109 = scmp.ne.s32.totalorder %s97, %s98
      %p110 = scmp.eq.s32.totalorder %s23, 1
      %p111 = por %p109, %p110
      %p113 = scmp.ne.s32.totalorder %s98, %s112
      %p114 = scmp.eq.s32.totalorder %s23, 0
      %p115 = por %p113, %p114
      %s116 = ssub.s32 %s24, %s43
      %s117 = ssub.s32 %s25, %s39
      %s118 = sor.u32 %s116, %s117
      %s119 = ssub.s32 %s26, %s35
      %s120 = sor.u32 %s118, %s119
      %p121 = scmp.eq.s32.totalorder %s120, 0
      %s123 = sadd.s32 %s122, 1
      %s124 = scalar_select %p121, %s122, %s123
      %p127 = pneg %p121
      %p128 = scmp.eq.s32.totalorder %s17, 1
      %p129 = por %p127, %p128
      %p130 = scmp.ne.s32.totalorder %s122, %s125
      %p131 = scmp.eq.s32.totalorder %s17, 0
      %p132 = por %p130, %p131
      %p133 = scmp.ne.s32.totalorder %s122, %s125
      %p134 = scmp.eq.s32.totalorder %s22, 1
      %p135 = por %p133, %p134
      %p136 = scmp.ne.s32.totalorder %s125, %s126
      %p137 = scmp.eq.s32.totalorder %s22, 0
      %p138 = por %p136, %p137
      %p139 = scmp.ne.s32.totalorder %s125, %s126
      %p140 = scmp.eq.s32.totalorder %s23, 1
      %p141 = por %p139, %p140
      %p143 = scmp.ne.s32.totalorder %s126, %s142
      %p144 = scmp.eq.s32.totalorder %s23, 0
      %p145 = por %p143, %p144
      %p146 = scmp.le.s32.totalorder 1, %s17
      %p147 = scmp.lt.s32.totalorder %s17, 3
      %p148 = pnand %p146, %p147
      %p149 = pneg %p148
      // Predicated region
      $region9: #{tpu_custom_call.1} parent=5 // pred_check
        _
      $region10: #{tpu_custom_call.1} parent=5 // pred_check_branch
        %151 = sbr.rel (%p148) target = $region12
      $region11: #{tpu_custom_call.1} parent=5 // pred_region
        %s152 = ssub.s32 %s17, 1
        // Predicated region
        $region13: #{tpu_custom_call.1} parent=11 // pred_check
          %p153 = pneg %p87
        $region14: #{tpu_custom_call.1} parent=11 // pred_check_branch
          %155 = sbr.rel (%p153) target = $region16
        $region15: #{tpu_custom_call.1} parent=11 // pred_region
          %s157 = ssub.s32 16, 16
          %158 = vsyncadd [#allocation6], %s157
          %s160 = sshll.u32 %s1, 4
          %s161 = int_to_ptr.vmem [resolvable:$true] %s160
          %163 = dma.vmem_to_smem %s161, 16, [#allocation7], [#allocation6]
        $region16: #{tpu_custom_call.1} parent=11 // pred_fallthru
          _
        // Predicated region
        $region17: #{tpu_custom_call.1} parent=11 // pred_check
          %p164 = pneg %p108
        $region18: #{tpu_custom_call.1} parent=11 // pred_check_branch
          %166 = sbr.rel (%p164) target = $region20
        $region19: #{tpu_custom_call.1} parent=11 // pred_region
          _
        $region20: #{tpu_custom_call.1} parent=11 // pred_fallthru
          _
      $region12: #{tpu_custom_call.1} parent=5 // pred_fallthru
        _
      %p167 = scmp.lt.s32.totalorder %s17, 2
      // Predicated region
      $region21: #{tpu_custom_call.1} parent=5 // pred_check
        %p168 = pneg %p167
      $region22: #{tpu_custom_call.1} parent=5 // pred_check_branch
        %170 = sbr.rel (%p168) target = $region24
      $region23: #{tpu_custom_call.1} parent=5 // pred_region
        // Predicated region
        $region25: #{tpu_custom_call.1} parent=23 // pred_check
          %p171 = pneg %p60
        $region26: #{tpu_custom_call.1} parent=23 // pred_check_branch
          %173 = sbr.rel (%p171) target = $region28
        $region27: #{tpu_custom_call.1} parent=23 // pred_region
          %s174 = sand.u32 %s50, 1
          %s175 = scalar_lea.sflag [#allocation4], %s174
          %s176 = sand.u32 %s50, 1
          %s177 = smul.addr %s176, 8
          %s178 = scalar_lea.vmem [#allocation3], %s177
          %s180 = ssub.s32 128, 128
          %181 = vsyncadd %s175, %s180
          %s182 = sadd.s32 %s26, %s25
          %s183 = smul.addr %s24, 4
          %s184 = sadd.s32 %s182, %s183
          %s185 = smul.addr %s184, 32
          %s186 = scalar_lea.hbm %s0, %s185
          %s187 = sshll.u32 %s178, 4
          %s188 = int_to_ptr.vmem [resolvable:$true] %s187
          %193 = dma.hbm_to_vmem [thread:$0]  %s186, 128, %s188, %s175, 32, 32, 2
        $region28: #{tpu_custom_call.1} parent=23 // pred_fallthru
          _
      $region24: #{tpu_custom_call.1} parent=5 // pred_fallthru
        _
      %p194 = scmp.le.s32.totalorder 1, %s17
      %p195 = scmp.lt.s32.totalorder %s17, 3
      %p196 = pnand %p194, %p195
      %p197 = pneg %p196
      // Predicated region
      $region29: #{tpu_custom_call.1} parent=5 // pred_check
        _
      $region30: #{tpu_custom_call.1} parent=5 // pred_check_branch
        %199 = sbr.rel (%p196) target = $region32
      $region31: #{tpu_custom_call.1} parent=5 // pred_region
        %s200 = ssub.s32 %s17, 1
        %s201 = sand.u32 %s53, 1
        %s202 = scalar_lea.sflag [#allocation4], %s201
        %s203 = sand.u32 %s53, 1
        %s204 = smul.addr %s203, 8
        %s205 = scalar_lea.vmem [#allocation3], %s204
        // Predicated region
        $region33: #{tpu_custom_call.1} parent=31 // pred_check
          %p206 = pneg %p66
        $region34: #{tpu_custom_call.1} parent=31 // pred_check_branch
          %208 = sbr.rel (%p206) target = $region36
        $region35: #{tpu_custom_call.1} parent=31 // pred_region
          %209 = dma.done %s202, 128
        $region36: #{tpu_custom_call.1} parent=31 // pred_fallthru
          _
        // Predicated region
        $region37: #{tpu_custom_call.1} parent=31 // pred_check
          %p210 = pneg %p87
        $region38: #{tpu_custom_call.1} parent=31 // pred_check_branch
          %212 = sbr.rel (%p210) target = $region40
        $region39: #{tpu_custom_call.1} parent=31 // pred_region
          %213 = dma.done [#allocation6], 16
        $region40: #{tpu_custom_call.1} parent=31 // pred_fallthru
          _
        %214 = sfence
        %s215 = sand.u32 %s53, 1
        %s216 = scalar_lea.sflag [#allocation4], %s215
        %s217 = sand.u32 %s53, 1
        %s218 = smul.addr %s217, 8
        %s219 = scalar_lea.vmem [#allocation3], %s218
        %p220 = pneg %p66
        %p221 = pneg %p63
        %p222 = pneg %p87
        %p223 = pneg %p84
        %p224 = pneg %p108
        %p225 = pneg %p105
        %p226 = pneg %p138
        %p227 = pneg %p135
        %s228 = sand.u32 %s125, 1
        %s229 = scalar_lea.sflag [#allocation5], %s228
        %s230 = sand.u32 %s125, 1
        %s231 = smul.addr %s230, 2
        %s232 = scalar_lea.vmem [#allocation8], %s231
        %v233 = vld [vmem:[%s205] sm:$0x3]
        %v234 = vld [vmem:[%s205 + $0x2] sm:$0x3]
        %v235 = vld [vmem:[%s205 + $0x4] sm:$0x3]
        %v236 = vld [vmem:[%s205 + $0x6] sm:$0x3]
        %s237 = sld [smem:[#allocation7]]
        %s238 = sld [smem:[#allocation7 + $0x1]]
        %s239 = sld [smem:[#allocation7 + $0x2]]
        %s240 = sld [smem:[#allocation7 + $0x3]]
        %s241 = sld [smem:[#allocation2]]
        %v242 = vstv %s237
        %v243 = vmul.f32 %v233, %v242
        %v244 = vstv %s241
        %v245 = vadd.f32 %v243, %v244
        %v246 = vstv %s238
        %v247 = vmul.f32 %v234, %v246
        %v248 = vadd.f32 %v245, %v247
        %v249 = vstv %s239
        %v250 = vmul.f32 %v235, %v249
        %v251 = vadd.f32 %v248, %v250
        %v252 = vstv %s240
        %v253 = vmul.f32 %v236, %v252
        %v254 = vadd.f32 %v251, %v253
        %v255 = vsub.f32 0.0, %v254
        %v256 = vmul.f32 %v255, 1.442695
        %v257 = vpow.pop %v256
        %v258 = vadd.f32 %v257, 1.0
        %v259 = vrcp.pop %v258
        %260 = vst [vmem:[%s232] sm:$0x3] %v259
        %s261 = sand.u32 %s125, 1
        %s262 = scalar_lea.sflag [#allocation5], %s261
        %s263 = sand.u32 %s125, 1
        %s264 = smul.addr %s263, 2
        %s265 = scalar_lea.vmem [#allocation8], %s264
        // Predicated region
        $region41: #{tpu_custom_call.1} parent=31 // pred_check
          %p266 = pneg %p135
        $region42: #{tpu_custom_call.1} parent=31 // pred_check_branch
          %268 = sbr.rel (%p266) target = $region44
        $region43: #{tpu_custom_call.1} parent=31 // pred_region
          %s270 = ssub.s32 32, 32
          %271 = vsyncadd %s262, %s270
          %s272 = sadd.s32 %s29, %s28
          %s273 = sadd.s32 %s272, %s27
          %s274 = smul.addr %s273, 32
          %s275 = scalar_lea.hbm %s3, %s274
          %s277 = sshll.u32 %s265, 4
          %s278 = int_to_ptr.vmem [resolvable:$true] %s277
          %280 = dma.vmem_to_hbm [thread:$0]  %s278, 32, %s275, %s262
        $region44: #{tpu_custom_call.1} parent=31 // pred_fallthru
          _
      $region32: #{tpu_custom_call.1} parent=5 // pred_fallthru
        _
      %p281 = scmp.le.s32.totalorder 2, %s17
      // Predicated region
      $region45: #{tpu_custom_call.1} parent=5 // pred_check
        %p282 = pneg %p281
      $region46: #{tpu_custom_call.1} parent=5 // pred_check_branch
        %284 = sbr.rel (%p282) target = $region48
      $region47: #{tpu_custom_call.1} parent=5 // pred_region
        %s285 = ssub.s32 %s17, 2
        // Predicated region
        $region49: #{tpu_custom_call.1} parent=47 // pred_check
          %p286 = pneg %p141
        $region50: #{tpu_custom_call.1} parent=47 // pred_check_branch
          %288 = sbr.rel (%p286) target = $region52
        $region51: #{tpu_custom_call.1} parent=47 // pred_region
          %s289 = sand.u32 %s126, 1
          %s290 = scalar_lea.sflag [#allocation5], %s289
          %s291 = sand.u32 %s126, 1
          %s292 = smul.addr %s291, 2
          %s293 = scalar_lea.vmem [#allocation8], %s292
          %294 = dma.done %s290, 32
        $region52: #{tpu_custom_call.1} parent=47 // pred_fallthru
          _
      $region48: #{tpu_custom_call.1} parent=5 // pred_fallthru
        _
    $region6: #{tpu_custom_call.1} parent=1 // loop_footer
      %s21 = sadd.s32 1, %s17
    $region7: #{tpu_custom_call.1} parent=1 // loop_footer_branch
      %16 = sbr.rel target = $region3
    $region8: #{tpu_custom_call.1} parent=1 // loop_exit
      _
    %295 = vsyncpa [#allocation4], 1
    %s296 = scalar_lea.sflag [#allocation4], 1
    %297 = vsyncpa %s296, 1
    %298 = vsyncpa [#allocation5], 1
    %s299 = scalar_lea.sflag [#allocation5], 1
    %300 = vsyncpa %s299, 1
    %301 = vsyncpa [#allocation6], 1
    %s302 = scalar_lea.sflag [#allocation6], 1
    %303 = vsyncpa %s302, 1

</llo_original>
